<compile_context>
chip_gen: v5e
topology: v5e:2x2
jax: 0.10.0
libtpu: 0.0.40
codegen_flags: <defaults>
</compile_context>

<pallas_src>
import functools

import jax
import jax.numpy as jnp
from jax.experimental import pallas as pl
from jax.experimental.pallas import tpu as pltpu


def _round_up(x, m):
    return ((x + m - 1) // m) * m


def mlp_kernel(x_ref,
               w1_ref, b1_ref,
               w2_ref, b2_ref,
               w3_ref, b3_ref,
               w4_ref, b4_ref,
               o_ref):
    # x arrives f32 straight from HBM; cast to bf16 in-kernel (VPU, hidden
    # under the MXU) instead of a separate wrapper HBM pass.
    x = x_ref[...].astype(jnp.bfloat16)                              # (TB, D_in)

    # fc1 + relu  (bf16 MXU operands, f32 accumulate / elementwise)
    h1 = jnp.dot(x, w1_ref[...], preferred_element_type=jnp.float32) + b1_ref[...]
    h1 = jnp.maximum(h1, 0.0)                                        # (TB, 128) f32
    # dropout1: identity (eval mode)

    # fc2 + tanh
    h2 = jnp.dot(h1.astype(jnp.bfloat16), w2_ref[...],
                 preferred_element_type=jnp.float32) + b2_ref[...]
    h2 = jnp.tanh(h2)                                                # (TB, 64) f32
    # dropout2: identity (eval mode)

    # fc3 + sigmoid
    h3 = jnp.dot(h2.astype(jnp.bfloat16), w3_ref[...],
                 preferred_element_type=jnp.float32) + b3_ref[...]
    h3 = jax.nn.sigmoid(h3)                                          # (TB, 32) f32
    # dropout3: identity (eval mode)

    # fc4 (K=32, N=1): VPU multiply + lane reduce instead of a 1-column MXU pass
    h4 = jnp.sum(h3 * w4_ref[...], axis=-1, keepdims=True) + b4_ref[...]
    o_ref[...] = jnp.tanh(h4).astype(o_ref.dtype)                    # (TB, 1)


def prepare_params(params):
    """One-time weight prep (hoisted out of the per-call forward path)."""
    return dict(
        w1=params["w1"].astype(jnp.bfloat16), b1=params["b1"],
        w2=params["w2"].astype(jnp.bfloat16), b2=params["b2"],
        w3=params["w3"].astype(jnp.bfloat16), b3=params["b3"],
        w4=params["w4"].reshape(1, -1).astype(jnp.float32),          # (1, 32)
        b4=params["b4"].reshape(1, 1).astype(jnp.float32),           # (1, 1)
    )


@functools.partial(jax.jit, static_argnames=("tile_b",))
def net_forward(x, prepared, tile_b=1024):
    """x: (B, D_in) float32 (unpadded, uncast). prepared: output of prepare_params."""
    B, D_in = x.shape
    p = prepared

    # Core-aware batch tile: keep >= 2 grid steps when B allows (v7x has 2 TCs
    # and the batch axis is marked "parallel"), multiple of 8 (f32 sublane rule),
    # capped at tile_b. The last block may be partial; OOB rows are harmless
    # (row-wise ops) and never written back.
    tb = max(8, min(tile_b, _round_up(pl.cdiv(B, 2), 8)))
    grid = (pl.cdiv(B, tb),)

    flops = 2 * B * (D_in * 128 + 128 * 64 + 64 * 32 + 32 * 1)
    transcendentals = B * (64 + 32 + 1)
    weight_bytes = ((D_in * 128 + 128 * 64 + 64 * 32) * 2            # bf16 weights
                    + (128 + 64 + 32) * 4                            # f32 biases
                    + 32 * 4 + 4)                                    # fc4 row + bias
    bytes_accessed = B * (D_in * 4 + 4) + weight_bytes

    def const_spec(shape):
        # Grid-invariant operand: stays resident in VMEM across all steps.
        return pl.BlockSpec(shape, lambda i: (0,) * len(shape))

    out = pl.pallas_call(
        mlp_kernel,
        out_shape=jax.ShapeDtypeStruct((B, 1), jnp.float32),
        grid=grid,
        in_specs=[
            pl.BlockSpec((tb, D_in), lambda i: (i, 0)),   # x tile (only pipelined input)
            const_spec(p["w1"].shape), const_spec(p["b1"].shape),
            const_spec(p["w2"].shape), const_spec(p["b2"].shape),
            const_spec(p["w3"].shape), const_spec(p["b3"].shape),
            const_spec(p["w4"].shape), const_spec(p["b4"].shape),
        ],
        out_specs=pl.BlockSpec((tb, 1), lambda i: (i, 0)),
        compiler_params=pltpu.CompilerParams(
            dimension_semantics=("parallel",),            # megacore split on v7x
            vmem_limit_bytes=32 * 1024 * 1024),           # insurance for v5e's 16 MiB default
        cost_estimate=pl.CostEstimate(
            flops=flops, transcendentals=transcendentals,
            bytes_accessed=bytes_accessed),
    )(x, p["w1"], p["b1"], p["w2"], p["b2"], p["w3"], p["b3"], p["w4"], p["b4"])

    return out


def init_params(key, input_size):
    """Deterministic init mirroring nn.Linear shapes (weights stored (in,out))."""
    ks = jax.random.split(key, 8)

    def linear(kw, kb, fan_in, fan_out):
        bound = 1.0 / jnp.sqrt(fan_in)
        w = jax.random.uniform(kw, (fan_in, fan_out), jnp.float32, -bound, bound)
        b = jax.random.uniform(kb, (1, fan_out), jnp.float32, -bound, bound)
        return w, b

    w1, b1 = linear(ks[0], ks[1], input_size, 128)
    w2, b2 = linear(ks[2], ks[3], 128, 64)
    w3, b3 = linear(ks[4], ks[5], 64, 32)
    w4, b4 = linear(ks[6], ks[7], 32, 1)
    return dict(w1=w1, b1=b1, w2=w2, b2=b2, w3=w3, b3=b3, w4=w4, b4=b4)


def reference_forward(x, p):
    """Pure-JAX reference emulating the kernel's bf16-operand / f32-accumulate math."""
    bf = jnp.bfloat16
    h = jnp.dot(x.astype(bf), p["w1"].astype(bf),
                preferred_element_type=jnp.float32) + p["b1"]
    h = jnp.maximum(h, 0.0)
    h = jnp.dot(h.astype(bf), p["w2"].astype(bf),
                preferred_element_type=jnp.float32) + p["b2"]
    h = jnp.tanh(h)
    h = jnp.dot(h.astype(bf), p["w3"].astype(bf),
                preferred_element_type=jnp.float32) + p["b3"]
    h = jax.nn.sigmoid(h)
    h = h @ p["w4"] + p["b4"]
    return jnp.tanh(h)


if __name__ == "__main__":
    key = jax.random.PRNGKey(0)
    k_x, k_p = jax.random.split(key)

    batch, input_size = 300, 32   # non-multiple of tile -> partial last block + 2-step grid
    x = jax.random.normal(k_x, (batch, input_size), jnp.float32)
    params = init_params(k_p, input_size)
    prepared = prepare_params(params)

    out = net_forward(x, prepared)
    jax.block_until_ready(out)

    ref = reference_forward(x, params)
    assert out.shape == (batch, 1)
    assert jnp.allclose(out, ref, atol=2e-2, rtol=2e-2), float(
        jnp.max(jnp.abs(out - ref)))

    print("KERNEL_OK")
</pallas_src>

<mosaic_0001>
module attributes {stable_mosaic.version = 11 : i64} {
  func.func @mlp_kernel(%arg0: i32, %arg1: memref<152x32xf32, #tpu.memory_space<vmem>>, %arg2: memref<32x128xbf16, #tpu.memory_space<vmem>>, %arg3: memref<1x128xf32, #tpu.memory_space<vmem>>, %arg4: memref<128x64xbf16, #tpu.memory_space<vmem>>, %arg5: memref<1x64xf32, #tpu.memory_space<vmem>>, %arg6: memref<64x32xbf16, #tpu.memory_space<vmem>>, %arg7: memref<1x32xf32, #tpu.memory_space<vmem>>, %arg8: memref<1x32xf32, #tpu.memory_space<vmem>>, %arg9: memref<1x1xf32, #tpu.memory_space<vmem>>, %arg10: memref<152x1xf32, #tpu.memory_space<vmem>>) attributes {dimension_semantics = [#tpu.dimension_semantics<parallel>], iteration_bounds = array<i64: 2>, scalar_prefetch = 0 : i64, scratch_operands = 0 : i64, tpu.core_type = #tpu.core_type<tc>, window_params = [{transform_indices = @transform_0, window_bounds = array<i64: 152, 32>}, {pipeline_mode = #tpu.pipeline_mode<synchronous>, transform_indices = @transform_1, window_bounds = array<i64: 32, 128>}, {pipeline_mode = #tpu.pipeline_mode<synchronous>, transform_indices = @transform_2, window_bounds = array<i64: 1, 128>}, {pipeline_mode = #tpu.pipeline_mode<synchronous>, transform_indices = @transform_3, window_bounds = array<i64: 128, 64>}, {pipeline_mode = #tpu.pipeline_mode<synchronous>, transform_indices = @transform_4, window_bounds = array<i64: 1, 64>}, {pipeline_mode = #tpu.pipeline_mode<synchronous>, transform_indices = @transform_5, window_bounds = array<i64: 64, 32>}, {pipeline_mode = #tpu.pipeline_mode<synchronous>, transform_indices = @transform_6, window_bounds = array<i64: 1, 32>}, {pipeline_mode = #tpu.pipeline_mode<synchronous>, transform_indices = @transform_7, window_bounds = array<i64: 1, 32>}, {pipeline_mode = #tpu.pipeline_mode<synchronous>, transform_indices = @transform_8, window_bounds = array<i64: 1, 1>}, {transform_indices = @transform_9, window_bounds = array<i64: 152, 1>}]} {
    %c0 = arith.constant 0 : index
    %c0_0 = arith.constant 0 : index
    %0 = vector.load %arg1[%c0, %c0_0] : memref<152x32xf32, #tpu.memory_space<vmem>>, vector<152x32xf32>
    %1 = arith.truncf %0 : vector<152x32xf32> to vector<152x32xbf16>
    %c0_1 = arith.constant 0 : index
    %c0_2 = arith.constant 0 : index
    %2 = vector.load %arg2[%c0_1, %c0_2] : memref<32x128xbf16, #tpu.memory_space<vmem>>, vector<32x128xbf16>
    %cst = arith.constant dense<0.000000e+00> : vector<152x128xf32>
    %3 = tpu.matmul %1, %2, %cst {dimension_numbers = #tpu.dot_dimension_numbers<[1], [0], [0], [1], [0, 0, 1, 1], [], []>} : vector<152x32xbf16>, vector<32x128xbf16>, vector<152x128xf32> -> vector<152x128xf32>
    %c0_3 = arith.constant 0 : index
    %c0_4 = arith.constant 0 : index
    %4 = vector.load %arg3[%c0_3, %c0_4] : memref<1x128xf32, #tpu.memory_space<vmem>>, vector<1x128xf32>
    %5 = vector.broadcast %4 : vector<1x128xf32> to vector<152x128xf32>
    %6 = arith.addf %3, %5 : vector<152x128xf32>
    %cst_5 = arith.constant 0.000000e+00 : f32
    %7 = vector.broadcast %cst_5 : f32 to vector<152x128xf32>
    %8 = arith.maximumf %6, %7 : vector<152x128xf32>
    %9 = arith.truncf %8 : vector<152x128xf32> to vector<152x128xbf16>
    %c0_6 = arith.constant 0 : index
    %c0_7 = arith.constant 0 : index
    %10 = vector.load %arg4[%c0_6, %c0_7] : memref<128x64xbf16, #tpu.memory_space<vmem>>, vector<128x64xbf16>
    %cst_8 = arith.constant dense<0.000000e+00> : vector<152x64xf32>
    %11 = tpu.matmul %9, %10, %cst_8 {dimension_numbers = #tpu.dot_dimension_numbers<[1], [0], [0], [1], [0, 0, 1, 1], [], []>} : vector<152x128xbf16>, vector<128x64xbf16>, vector<152x64xf32> -> vector<152x64xf32>
    %c0_9 = arith.constant 0 : index
    %c0_10 = arith.constant 0 : index
    %12 = vector.load %arg5[%c0_9, %c0_10] : memref<1x64xf32, #tpu.memory_space<vmem>>, vector<1x64xf32>
    %13 = vector.broadcast %12 : vector<1x64xf32> to vector<152x64xf32>
    %14 = arith.addf %11, %13 : vector<152x64xf32>
    %15 = math.tanh %14 : vector<152x64xf32>
    %16 = arith.truncf %15 : vector<152x64xf32> to vector<152x64xbf16>
    %c0_11 = arith.constant 0 : index
    %c0_12 = arith.constant 0 : index
    %17 = vector.load %arg6[%c0_11, %c0_12] : memref<64x32xbf16, #tpu.memory_space<vmem>>, vector<64x32xbf16>
    %cst_13 = arith.constant dense<0.000000e+00> : vector<152x32xf32>
    %18 = tpu.matmul %16, %17, %cst_13 {dimension_numbers = #tpu.dot_dimension_numbers<[1], [0], [0], [1], [0, 0, 1, 1], [], []>} : vector<152x64xbf16>, vector<64x32xbf16>, vector<152x32xf32> -> vector<152x32xf32>
    %c0_14 = arith.constant 0 : index
    %c0_15 = arith.constant 0 : index
    %19 = vector.load %arg7[%c0_14, %c0_15] : memref<1x32xf32, #tpu.memory_space<vmem>>, vector<1x32xf32>
    %20 = vector.broadcast %19 : vector<1x32xf32> to vector<152x32xf32>
    %21 = arith.addf %18, %20 : vector<152x32xf32>
    %22 = arith.negf %21 : vector<152x32xf32>
    %23 = math.exp %22 : vector<152x32xf32>
    %cst_16 = arith.constant 1.000000e+00 : f32
    %24 = vector.broadcast %cst_16 : f32 to vector<152x32xf32>
    %25 = arith.addf %24, %23 : vector<152x32xf32>
    %26 = arith.divf %24, %25 : vector<152x32xf32>
    %c0_17 = arith.constant 0 : index
    %c0_18 = arith.constant 0 : index
    %27 = vector.load %arg8[%c0_17, %c0_18] : memref<1x32xf32, #tpu.memory_space<vmem>>, vector<1x32xf32>
    %28 = vector.broadcast %27 : vector<1x32xf32> to vector<152x32xf32>
    %29 = arith.mulf %26, %28 : vector<152x32xf32>
    %cst_19 = arith.constant dense<0.000000e+00> : vector<152xf32>
    %30 = vector.multi_reduction <add>, %29, %cst_19 [1] : vector<152x32xf32> to vector<152xf32>
    %31 = vector.shape_cast %30 : vector<152xf32> to vector<152x1xf32>
    %c0_20 = arith.constant 0 : index
    %c0_21 = arith.constant 0 : index
    %32 = vector.load %arg9[%c0_20, %c0_21] : memref<1x1xf32, #tpu.memory_space<vmem>>, vector<1x1xf32>
    %33 = vector.broadcast %32 : vector<1x1xf32> to vector<152x1xf32>
    %34 = arith.addf %31, %33 : vector<152x1xf32>
    %35 = math.tanh %34 : vector<152x1xf32>
    %c0_22 = arith.constant 0 : index
    %c0_23 = arith.constant 0 : index
    %36 = vector.load %arg10[%c0_22, %c0_23] : memref<152x1xf32, #tpu.memory_space<vmem>>, vector<152x1xf32>
    tpu.vector_store %arg10[%c0_22, %c0_23], %35 {strides = array<i32>} : memref<152x1xf32, #tpu.memory_space<vmem>>, vector<152x1xf32>,
    return
  }
  func.func @transform_0(%arg0: i32) -> (i32, i32) {
    %c0_i32 = arith.constant 0 : i32
    %c0_i32_0 = arith.constant 0 : i32
    return %arg0, %c0_i32 : i32, i32
  }
  func.func @transform_1(%arg0: i32) -> (i32, i32) {
    %c0_i32 = arith.constant 0 : i32
    %c0_i32_0 = arith.constant 0 : i32
    %c0_i32_1 = arith.constant 0 : i32
    return %c0_i32, %c0_i32_0 : i32, i32
  }
  func.func @transform_2(%arg0: i32) -> (i32, i32) {
    %c0_i32 = arith.constant 0 : i32
    %c0_i32_0 = arith.constant 0 : i32
    %c0_i32_1 = arith.constant 0 : i32
    return %c0_i32, %c0_i32_0 : i32, i32
  }
  func.func @transform_3(%arg0: i32) -> (i32, i32) {
    %c0_i32 = arith.constant 0 : i32
    %c0_i32_0 = arith.constant 0 : i32
    %c0_i32_1 = arith.constant 0 : i32
    return %c0_i32, %c0_i32_0 : i32, i32
  }
  func.func @transform_4(%arg0: i32) -> (i32, i32) {
    %c0_i32 = arith.constant 0 : i32
    %c0_i32_0 = arith.constant 0 : i32
    %c0_i32_1 = arith.constant 0 : i32
    return %c0_i32, %c0_i32_0 : i32, i32
  }
  func.func @transform_5(%arg0: i32) -> (i32, i32) {
    %c0_i32 = arith.constant 0 : i32
    %c0_i32_0 = arith.constant 0 : i32
    %c0_i32_1 = arith.constant 0 : i32
    return %c0_i32, %c0_i32_0 : i32, i32
  }
  func.func @transform_6(%arg0: i32) -> (i32, i32) {
    %c0_i32 = arith.constant 0 : i32
    %c0_i32_0 = arith.constant 0 : i32
    %c0_i32_1 = arith.constant 0 : i32
    return %c0_i32, %c0_i32_0 : i32, i32
  }
  func.func @transform_7(%arg0: i32) -> (i32, i32) {
    %c0_i32 = arith.constant 0 : i32
    %c0_i32_0 = arith.constant 0 : i32
    %c0_i32_1 = arith.constant 0 : i32
    return %c0_i32, %c0_i32_0 : i32, i32
  }
  func.func @transform_8(%arg0: i32) -> (i32, i32) {
    %c0_i32 = arith.constant 0 : i32
    %c0_i32_0 = arith.constant 0 : i32
    %c0_i32_1 = arith.constant 0 : i32
    return %c0_i32, %c0_i32_0 : i32, i32
  }
  func.func @transform_9(%arg0: i32) -> (i32, i32) {
    %c0_i32 = arith.constant 0 : i32
    %c0_i32_0 = arith.constant 0 : i32
    return %arg0, %c0_i32 : i32, i32
  }
}

</mosaic_0001>

<llo_original>
// kernel: net_forward.1
$region0: #{net_forward.1}
  #allocation0 [shape = 'u32[]', space=smem, size = 0x4, offset = 0x4, fixed_abs, tag = 'smem constant byte address 0x4 - core index']
  #allocation1 [shape = 'u32[72,128]{1,0:T(1,128)}', space=vmem, size = 0x9000, scoped, tag = 'internal scratch']
  #allocation2 [shape = 'f32[1,1]{1,0:T(1,128)S(1)}', space=vmem, size = 0x200, scoped, tag = 'scoped memory for net_forward.1']
  %s0 = inlined_call_operand.vmem [shape: f32[300,32], index: 0, kind: input, shape index: {}]
  %s1 = inlined_call_operand.vmem [shape: bf16[32,128], index: 1, kind: input, shape index: {}]
  %s2 = inlined_call_operand.vmem [shape: f32[1,128], index: 2, kind: input, shape index: {}]
  %s3 = inlined_call_operand.vmem [shape: bf16[128,64], index: 3, kind: input, shape index: {}]
  %s4 = inlined_call_operand.vmem [shape: f32[1,64], index: 4, kind: input, shape index: {}]
  %s5 = inlined_call_operand.vmem [shape: bf16[64,32], index: 5, kind: input, shape index: {}]
  %s6 = inlined_call_operand.vmem [shape: f32[1,32], index: 6, kind: input, shape index: {}]
  %s7 = inlined_call_operand.vmem [shape: f32[1,32], index: 7, kind: input, shape index: {}]
  %s8 = inlined_call_operand.<no memory space> [shape: f32[1,1], index: 8, kind: input, shape index: {}]
  %s9 = inlined_call_operand.vmem [shape: f32[300,1], index: 9, kind: output, shape index: {}]
  %s10 = sld [smem:[#allocation0]]
  $region69: #{net_forward.1} parent=0
    _
  %s12 = ssub.s32 1, %s10
  %s13 = scalar_select 0, %s12, %s10
  %v14 = vstv %s8
  %15 = vst [vmem:[#allocation2] sm:$0x1] %v14
  loop: start=0, step=1, limit=4
  $region2: #{net_forward.1} parent=0 // loop_pre_header
    _
  $region3: #{net_forward.1} parent=0 // loop_header
    %s17 = sphi 0, %s21
    %p18 = scmp.ge.s32.totalorder %s17, 4
    %s27 = sphi 0, %s29
    %s30 = sphi 0, %s27
    %s31 = sphi 0, %s30
    %s47 = sphi 0, %s31
    %s51 = sphi 0, %s51
    %s53 = sphi 0, %s51
    %s54 = sphi 0, %s53
    %s68 = sphi 0, %s54
    %s72 = sphi 0, %s72
    %s74 = sphi 0, %s72
    %s75 = sphi 0, %s74
    %s89 = sphi 0, %s75
    %s93 = sphi 0, %s93
    %s95 = sphi 0, %s93
    %s96 = sphi 0, %s95
    %s110 = sphi 0, %s96
    %s114 = sphi 0, %s114
    %s116 = sphi 0, %s114
    %s117 = sphi 0, %s116
    %s131 = sphi 0, %s117
    %s135 = sphi 0, %s135
    %s137 = sphi 0, %s135
    %s138 = sphi 0, %s137
    %s152 = sphi 0, %s138
    %s156 = sphi 0, %s156
    %s158 = sphi 0, %s156
    %s159 = sphi 0, %s158
    %s173 = sphi 0, %s159
    %s177 = sphi 0, %s177
    %s179 = sphi 0, %s177
    %s180 = sphi 0, %s179
    %s194 = sphi 0, %s180
    %s198 = sphi 0, %s198
    %s200 = sphi 0, %s198
    %s201 = sphi 0, %s200
    %s215 = sphi 0, %s201
    %s221 = sphi 0, %s223
    %s224 = sphi 0, %s221
    %s225 = sphi 0, %s224
    %s241 = sphi 0, %s225
  $region4: #{net_forward.1} parent=0 // loop_header_branch
    %20 = sbr.rel (%p18) target = $region8
  $region5: #{net_forward.1} parent=0 // loop_body
    %s22 = ssub.s32 %s17, 1
    %s23 = ssub.s32 %s17, 2
    %s24 = sadd.s32 %s17, 1
    %s25 = ssub.s32 %s17, %s24
    %p26 = scmp.eq.s32.totalorder %s25, 0
    %s28 = sadd.s32 %s27, 1
    %s29 = scalar_select %p26, %s27, %s28
    %p32 = pneg %p26
    %p33 = scmp.eq.s32.totalorder %s17, 1
    %p34 = por %p32, %p33
    %p35 = scmp.ne.s32.totalorder %s27, %s30
    %p36 = scmp.eq.s32.totalorder %s17, 0
    %p37 = por %p35, %p36
    %p38 = scmp.ne.s32.totalorder %s27, %s30
    %p39 = scmp.eq.s32.totalorder %s22, 1
    %p40 = por %p38, %p39
    %p41 = scmp.ne.s32.totalorder %s30, %s31
    %p42 = scmp.eq.s32.totalorder %s22, 0
    %p43 = por %p41, %p42
    %p44 = scmp.ne.s32.totalorder %s30, %s31
    %p45 = scmp.eq.s32.totalorder %s23, 1
    %p46 = por %p44, %p45
    %p48 = scmp.ne.s32.totalorder %s31, %s47
    %p49 = scmp.eq.s32.totalorder %s23, 0
    %p50 = por %p48, %p49
    %s52 = sadd.s32 %s51, 1
    %p55 = scmp.eq.s32.totalorder %s17, 1
    %p56 = scmp.ne.s32.totalorder %s51, %s53
    %p57 = scmp.eq.s32.totalorder %s17, 0
    %p58 = por %p56, %p57
    %p59 = scmp.ne.s32.totalorder %s51, %s53
    %p60 = scmp.eq.s32.totalorder %s22, 1
    %p61 = por %p59, %p60
    %p62 = scmp.ne.s32.totalorder %s53, %s54
    %p63 = scmp.eq.s32.totalorder %s22, 0
    %p64 = por %p62, %p63
    %p65 = scmp.ne.s32.totalorder %s53, %s54
    %p66 = scmp.eq.s32.totalorder %s23, 1
    %p67 = por %p65, %p66
    %p69 = scmp.ne.s32.totalorder %s54, %s68
    %p70 = scmp.eq.s32.totalorder %s23, 0
    %p71 = por %p69, %p70
    %s73 = sadd.s32 %s72, 1
    %p76 = scmp.eq.s32.totalorder %s17, 1
    %p77 = scmp.ne.s32.totalorder %s72, %s74
    %p78 = scmp.eq.s32.totalorder %s17, 0
    %p79 = por %p77, %p78
    %p80 = scmp.ne.s32.totalorder %s72, %s74
    %p81 = scmp.eq.s32.totalorder %s22, 1
    %p82 = por %p80, %p81
    %p83 = scmp.ne.s32.totalorder %s74, %s75
    %p84 = scmp.eq.s32.totalorder %s22, 0
    %p85 = por %p83, %p84
    %p86 = scmp.ne.s32.totalorder %s74, %s75
    %p87 = scmp.eq.s32.totalorder %s23, 1
    %p88 = por %p86, %p87
    %p90 = scmp.ne.s32.totalorder %s75, %s89
    %p91 = scmp.eq.s32.totalorder %s23, 0
    %p92 = por %p90, %p91
    %s94 = sadd.s32 %s93, 1
    %p97 = scmp.eq.s32.totalorder %s17, 1
    %p98 = scmp.ne.s32.totalorder %s93, %s95
    %p99 = scmp.eq.s32.totalorder %s17, 0
    %p100 = por %p98, %p99
    %p101 = scmp.ne.s32.totalorder %s93, %s95
    %p102 = scmp.eq.s32.totalorder %s22, 1
    %p103 = por %p101, %p102
    %p104 = scmp.ne.s32.totalorder %s95, %s96
    %p105 = scmp.eq.s32.totalorder %s22, 0
    %p106 = por %p104, %p105
    %p107 = scmp.ne.s32.totalorder %s95, %s96
    %p108 = scmp.eq.s32.totalorder %s23, 1
    %p109 = por %p107, %p108
    %p111 = scmp.ne.s32.totalorder %s96, %s110
    %p112 = scmp.eq.s32.totalorder %s23, 0
    %p113 = por %p111, %p112
    %s115 = sadd.s32 %s114, 1
    %p118 = scmp.eq.s32.totalorder %s17, 1
    %p119 = scmp.ne.s32.totalorder %s114, %s116
    %p120 = scmp.eq.s32.totalorder %s17, 0
    %p121 = por %p119, %p120
    %p122 = scmp.ne.s32.totalorder %s114, %s116
    %p123 = scmp.eq.s32.totalorder %s22, 1
    %p124 = por %p122, %p123
    %p125 = scmp.ne.s32.totalorder %s116, %s117
    %p126 = scmp.eq.s32.totalorder %s22, 0
    %p127 = por %p125, %p126
    %p128 = scmp.ne.s32.totalorder %s116, %s117
    %p129 = scmp.eq.s32.totalorder %s23, 1
    %p130 = por %p128, %p129
    %p132 = scmp.ne.s32.totalorder %s117, %s131
    %p133 = scmp.eq.s32.totalorder %s23, 0
    %p134 = por %p132, %p133
    %s136 = sadd.s32 %s135, 1
    %p139 = scmp.eq.s32.totalorder %s17, 1
    %p140 = scmp.ne.s32.totalorder %s135, %s137
    %p141 = scmp.eq.s32.totalorder %s17, 0
    %p142 = por %p140, %p141
    %p143 = scmp.ne.s32.totalorder %s135, %s137
    %p144 = scmp.eq.s32.totalorder %s22, 1
    %p145 = por %p143, %p144
    %p146 = scmp.ne.s32.totalorder %s137, %s138
    %p147 = scmp.eq.s32.totalorder %s22, 0
    %p148 = por %p146, %p147
    %p149 = scmp.ne.s32.totalorder %s137, %s138
    %p150 = scmp.eq.s32.totalorder %s23, 1
    %p151 = por %p149, %p150
    %p153 = scmp.ne.s32.totalorder %s138, %s152
    %p154 = scmp.eq.s32.totalorder %s23, 0
    %p155 = por %p153, %p154
    %s157 = sadd.s32 %s156, 1
    %p160 = scmp.eq.s32.totalorder %s17, 1
    %p161 = scmp.ne.s32.totalorder %s156, %s158
    %p162 = scmp.eq.s32.totalorder %s17, 0
    %p163 = por %p161, %p162
    %p164 = scmp.ne.s32.totalorder %s156, %s158
    %p165 = scmp.eq.s32.totalorder %s22, 1
    %p166 = por %p164, %p165
    %p167 = scmp.ne.s32.totalorder %s158, %s159
    %p168 = scmp.eq.s32.totalorder %s22, 0
    %p169 = por %p167, %p168
    %p170 = scmp.ne.s32.totalorder %s158, %s159
    %p171 = scmp.eq.s32.totalorder %s23, 1
    %p172 = por %p170, %p171
    %p174 = scmp.ne.s32.totalorder %s159, %s173
    %p175 = scmp.eq.s32.totalorder %s23, 0
    %p176 = por %p174, %p175
    %s178 = sadd.s32 %s177, 1
    %p181 = scmp.eq.s32.totalorder %s17, 1
    %p182 = scmp.ne.s32.totalorder %s177, %s179
    %p183 = scmp.eq.s32.totalorder %s17, 0
    %p184 = por %p182, %p183
    %p185 = scmp.ne.s32.totalorder %s177, %s179
    %p186 = scmp.eq.s32.totalorder %s22, 1
    %p187 = por %p185, %p186
    %p188 = scmp.ne.s32.totalorder %s179, %s180
    %p189 = scmp.eq.s32.totalorder %s22, 0
    %p190 = por %p188, %p189
    %p191 = scmp.ne.s32.totalorder %s179, %s180
    %p192 = scmp.eq.s32.totalorder %s23, 1
    %p193 = por %p191, %p192
    %p195 = scmp.ne.s32.totalorder %s180, %s194
    %p196 = scmp.eq.s32.totalorder %s23, 0
    %p197 = por %p195, %p196
    %s199 = sadd.s32 %s198, 1
    %p202 = scmp.eq.s32.totalorder %s17, 1
    %p203 = scmp.ne.s32.totalorder %s198, %s200
    %p204 = scmp.eq.s32.totalorder %s17, 0
    %p205 = por %p203, %p204
    %p206 = scmp.ne.s32.totalorder %s198, %s200
    %p207 = scmp.eq.s32.totalorder %s22, 1
    %p208 = por %p206, %p207
    %p209 = scmp.ne.s32.totalorder %s200, %s201
    %p210 = scmp.eq.s32.totalorder %s22, 0
    %p211 = por %p209, %p210
    %p212 = scmp.ne.s32.totalorder %s200, %s201
    %p213 = scmp.eq.s32.totalorder %s23, 1
    %p214 = por %p212, %p213
    %p216 = scmp.ne.s32.totalorder %s201, %s215
    %p217 = scmp.eq.s32.totalorder %s23, 0
    %p218 = por %p216, %p217
    %s219 = ssub.s32 %s17, %s24
    %p220 = scmp.eq.s32.totalorder %s219, 0
    %s222 = sadd.s32 %s221, 1
    %s223 = scalar_select %p220, %s221, %s222
    %p226 = pneg %p220
    %p227 = scmp.eq.s32.totalorder %s17, 1
    %p228 = por %p226, %p227
    %p229 = scmp.ne.s32.totalorder %s221, %s224
    %p230 = scmp.eq.s32.totalorder %s17, 0
    %p231 = por %p229, %p230
    %p232 = scmp.ne.s32.totalorder %s221, %s224
    %p233 = scmp.eq.s32.totalorder %s22, 1
    %p234 = por %p232, %p233
    %p235 = scmp.ne.s32.totalorder %s224, %s225
    %p236 = scmp.eq.s32.totalorder %s22, 0
    %p237 = por %p235, %p236
    %p238 = scmp.ne.s32.totalorder %s224, %s225
    %p239 = scmp.eq.s32.totalorder %s23, 1
    %p240 = por %p238, %p239
    %p242 = scmp.ne.s32.totalorder %s225, %s241
    %p243 = scmp.eq.s32.totalorder %s23, 0
    %p244 = por %p242, %p243
    %p245 = scmp.le.s32.totalorder 1, %s17
    %p246 = scmp.lt.s32.totalorder %s17, 3
    %p247 = pnand %p245, %p246
    %p248 = pneg %p247
    // Predicated region
    $region9: #{net_forward.1} parent=5 // pred_check
      _
    $region10: #{net_forward.1} parent=5 // pred_check_branch
      %250 = sbr.rel (%p247) target = $region12
    $region11: #{net_forward.1} parent=5 // pred_region
      %s251 = ssub.s32 %s17, 1
      // Predicated region
      $region13: #{net_forward.1} parent=11 // pred_check
        %p252 = pneg %p64
      $region14: #{net_forward.1} parent=11 // pred_check_branch
        %254 = sbr.rel (%p252) target = $region16
      $region15: #{net_forward.1} parent=11 // pred_region
        _
      $region16: #{net_forward.1} parent=11 // pred_fallthru
        _
      // Predicated region
      $region17: #{net_forward.1} parent=11 // pred_check
        %p255 = pneg %p85
      $region18: #{net_forward.1} parent=11 // pred_check_branch
        %257 = sbr.rel (%p255) target = $region20
      $region19: #{net_forward.1} parent=11 // pred_region
        _
      $region20: #{net_forward.1} parent=11 // pred_fallthru
        _
      // Predicated region
      $region21: #{net_forward.1} parent=11 // pred_check
        %p258 = pneg %p106
      $region22: #{net_forward.1} parent=11 // pred_check_branch
        %260 = sbr.rel (%p258) target = $region24
      $region23: #{net_forward.1} parent=11 // pred_region
        _
      $region24: #{net_forward.1} parent=11 // pred_fallthru
        _
      // Predicated region
      $region25: #{net_forward.1} parent=11 // pred_check
        %p261 = pneg %p127
      $region26: #{net_forward.1} parent=11 // pred_check_branch
        %263 = sbr.rel (%p261) target = $region28
      $region27: #{net_forward.1} parent=11 // pred_region
        _
      $region28: #{net_forward.1} parent=11 // pred_fallthru
        _
      // Predicated region
      $region29: #{net_forward.1} parent=11 // pred_check
        %p264 = pneg %p148
      $region30: #{net_forward.1} parent=11 // pred_check_branch
        %266 = sbr.rel (%p264) target = $region32
      $region31: #{net_forward.1} parent=11 // pred_region
        _
      $region32: #{net_forward.1} parent=11 // pred_fallthru
        _
      // Predicated region
      $region33: #{net_forward.1} parent=11 // pred_check
        %p267 = pneg %p169
      $region34: #{net_forward.1} parent=11 // pred_check_branch
        %269 = sbr.rel (%p267) target = $region36
      $region35: #{net_forward.1} parent=11 // pred_region
        _
      $region36: #{net_forward.1} parent=11 // pred_fallthru
        _
      // Predicated region
      $region37: #{net_forward.1} parent=11 // pred_check
        %p270 = pneg %p190
      $region38: #{net_forward.1} parent=11 // pred_check_branch
        %272 = sbr.rel (%p270) target = $region40
      $region39: #{net_forward.1} parent=11 // pred_region
        _
      $region40: #{net_forward.1} parent=11 // pred_fallthru
        _
      // Predicated region
      $region41: #{net_forward.1} parent=11 // pred_check
        %p273 = pneg %p211
      $region42: #{net_forward.1} parent=11 // pred_check_branch
        %275 = sbr.rel (%p273) target = $region44
      $region43: #{net_forward.1} parent=11 // pred_region
        _
      $region44: #{net_forward.1} parent=11 // pred_fallthru
        _
    $region12: #{net_forward.1} parent=5 // pred_fallthru
      _
    %p276 = scmp.lt.s32.totalorder %s17, 2
    // Predicated region
    $region45: #{net_forward.1} parent=5 // pred_check
      %p277 = pneg %p276
    $region46: #{net_forward.1} parent=5 // pred_check_branch
      %279 = sbr.rel (%p277) target = $region48
    $region47: #{net_forward.1} parent=5 // pred_region
      // Predicated region
      $region49: #{net_forward.1} parent=47 // pred_check
        %p280 = pneg %p37
      $region50: #{net_forward.1} parent=47 // pred_check_branch
        %282 = sbr.rel (%p280) target = $region52
      $region51: #{net_forward.1} parent=47 // pred_region
        %s283 = smul.u32 19, %s17
        %p284 = scmp.lt.s32.totalorder %s283, 37
        %s285 = scalar_select %p284, %s283, 37
        %s286 = smul.addr %s285, 8
        %s287 = scalar_lea.vmem %s0, %s286
        %s288 = smul.u32 19, %s17
      $region52: #{net_forward.1} parent=47 // pred_fallthru
        _
    $region48: #{net_forward.1} parent=5 // pred_fallthru
      _
    %p289 = scmp.le.s32.totalorder 1, %s17
    %p290 = scmp.lt.s32.totalorder %s17, 3
    %p291 = pnand %p289, %p290
    %p292 = pneg %p291
    // Predicated region
    $region53: #{net_forward.1} parent=5 // pred_check
      _
    $region54: #{net_forward.1} parent=5 // pred_check_branch
      %294 = sbr.rel (%p291) target = $region56
    $region55: #{net_forward.1} parent=5 // pred_region
      %s295 = ssub.s32 %s17, 1
      %s296 = smul.u32 19, %s22
      %p297 = scmp.lt.s32.totalorder %s296, 37
      %s298 = scalar_select %p297, %s296, 37
      %s299 = smul.addr %s298, 8
      %s300 = scalar_lea.vmem %s0, %s299
      %p301 = pneg %p43
      %p302 = pneg %p40
      %p303 = pneg %p64
      %p304 = pneg %p61
      %p305 = pneg %p85
      %p306 = pneg %p82
      %p307 = pneg %p106
      %p308 = pneg %p103
      %p309 = pneg %p127
      %p310 = pneg %p124
      %p311 = pneg %p148
      %p312 = pneg %p145
      %p313 = pneg %p169
      %p314 = pneg %p166
      %p315 = pneg %p190
      %p316 = pneg %p187
      %p317 = pneg %p211
      %p318 = pneg %p208
      %p319 = pneg %p237
      %p320 = pneg %p234
      %s321 = smul.u32 19, %s22
      %p322 = scmp.lt.s32.totalorder %s321, 37
      %s323 = scalar_select %p322, %s321, 37
      %s324 = smul.addr %s323, 8
      %s325 = scalar_lea.vmem %s9, %s324
      %s326 = smul.u32 19, %s22
      %p327 = scmp.lt.s32.totalorder %s326, 37
      %s328 = scalar_select %p327, %s326, 37
      %s329 = smul.addr %s328, 8
      %s330 = scalar_lea.vmem %s0, %s329
      %s331 = smul.u32 19, %s22
      %s332 = smul.u32 19, %s22
      %p333 = scmp.lt.s32.totalorder %s332, 37
      %s334 = scalar_select %p333, %s332, 37
      %s335 = smul.addr %s334, 8
      %s336 = scalar_lea.vmem %s9, %s335
      %s337 = smul.u32 19, %s22
      %v339 = vld [vmem:[%s330] sm:$0xff]
      %v340 = vld [vmem:[%s330 + $0x8] sm:$0xff]
      %v341 = vld [vmem:[%s330 + $0x10] sm:$0xff]
      %v342 = vld [vmem:[%s330 + $0x18] sm:$0xff]
      %v343 = vld [vmem:[%s330 + $0x20] sm:$0xff]
      %v344 = vld [vmem:[%s330 + $0x28] sm:$0xff]
      %v345 = vld [vmem:[%s330 + $0x30] sm:$0xff]
      %v346 = vld [vmem:[%s330 + $0x38] sm:$0xff]
      %v347 = vld [vmem:[%s330 + $0x40] sm:$0xff]
      %v348 = vld [vmem:[%s330 + $0x48] sm:$0xff]
      %v349 = vld [vmem:[%s330 + $0x50] sm:$0xff]
      %v350 = vld [vmem:[%s330 + $0x58] sm:$0xff]
      %v351 = vld [vmem:[%s330 + $0x60] sm:$0xff]
      %v352 = vld [vmem:[%s330 + $0x68] sm:$0xff]
      %v353 = vld [vmem:[%s330 + $0x70] sm:$0xff]
      %v354 = vld [vmem:[%s330 + $0x78] sm:$0xff]
      %v355 = vld [vmem:[%s330 + $0x80] sm:$0xff]
      %v356 = vld [vmem:[%s330 + $0x88] sm:$0xff]
      %v357 = vld [vmem:[%s330 + $0x90] sm:$0xff]
      %v358 = vpack.c.bf16 %v340, %v339
      %v359 = vpack.c.bf16 %v342, %v341
      %v360 = vpack.c.bf16 %v344, %v343
      %v361 = vpack.c.bf16 %v346, %v345
      %v362 = vpack.c.bf16 %v348, %v347
      %v363 = vpack.c.bf16 %v350, %v349
      %v364 = vpack.c.bf16 %v352, %v351
      %v365 = vpack.c.bf16 %v354, %v353
      %v366 = vpack.c.bf16 %v356, %v355
      %v367 = vpack.c.bf16 %v357, %v357
      %v368 = vld [vmem:[%s1] sm:$0xf]
      %v369 = vld [vmem:[%s1 + $0x4] sm:$0xf]
      %v370 = vld [vmem:[%s1 + $0x8] sm:$0xf]
      %v371 = vld [vmem:[%s1 + $0xc] sm:$0xf]
      %v372 = vld [vmem:[%s2] sm:$0x1]
      %v374 = vperm.slane %v372, 0
      %v380 = vunpack.c.l.b16 %v368
      %v381 = vunpack.c.l.b16 %v369
      %v382 = vunpack.c.l.b16 %v370
      %v383 = vunpack.c.l.b16 %v371
      %v384 = vpack.c.b16 %v381, %v380
      %v385 = vpack.c.b16 %v383, %v382
      %vm388 = vcmask 261120
      %v390 = vsel %vm388, %v358, 0
      %v393 = vsel %vm388, %v359, 0
      %v396 = vsel %vm388, %v360, 0
      %v399 = vsel %vm388, %v361, 0
      %v402 = vsel %vm388, %v362, 0
      %v405 = vsel %vm388, %v363, 0
      %v408 = vsel %vm388, %v364, 0
      %v411 = vsel %vm388, %v365, 0
      %v414 = vsel %vm388, %v366, 0
      %v417 = vsel %vm388, %v367, 0
      %419 = vmatpush.bf16.msra.mxu0 0
      %420 = vmatpush.bf16.msra.mxu0 0
      %421 = vmatpush.bf16.msra.mxu0 0
      %422 = vmatpush.bf16.msra.mxu0 0
      %423 = vmatpush.bf16.msra.mxu0 0
      %424 = vmatpush.bf16.msra.mxu0 0
      %425 = vmatpush.bf16.msra.mxu0 %v385
      %426 = vmatpush.bf16.msra.mxu0 %v384
      %427 = vmatmul.bf16.gmra.mxu0 %v390
      %v428 = vpop.f32.mrf.mxu0
      %v429 = vadd.f32 %v374, %v428
      %v430 = vpop.f32.mrf.mxu0
      %v431 = vadd.f32 %v374, %v430
      %432 = vmatmul.bf16.gmra.mxu0 %v393
      %v433 = vpop.f32.mrf.mxu0
      %v434 = vadd.f32 %v374, %v433
      %v435 = vpop.f32.mrf.mxu0
      %v436 = vadd.f32 %v374, %v435
      %437 = vmatmul.bf16.gmra.mxu0 %v396
      %v438 = vpop.f32.mrf.mxu0
      %v439 = vadd.f32 %v374, %v438
      %v440 = vpop.f32.mrf.mxu0
      %v441 = vadd.f32 %v374, %v440
      %442 = vmatmul.bf16.gmra.mxu0 %v399
      %v443 = vpop.f32.mrf.mxu0
      %v444 = vadd.f32 %v374, %v443
      %v445 = vpop.f32.mrf.mxu0
      %v446 = vadd.f32 %v374, %v445
      %447 = vmatmul.bf16.gmra.mxu0 %v402
      %v448 = vpop.f32.mrf.mxu0
      %v449 = vadd.f32 %v374, %v448
      %v450 = vpop.f32.mrf.mxu0
      %v451 = vadd.f32 %v374, %v450
      %452 = vmatmul.bf16.gmra.mxu0 %v405
      %v453 = vpop.f32.mrf.mxu0
      %v454 = vadd.f32 %v374, %v453
      %v455 = vpop.f32.mrf.mxu0
      %v456 = vadd.f32 %v374, %v455
      %457 = vmatmul.bf16.gmra.mxu0 %v408
      %v458 = vpop.f32.mrf.mxu0
      %v459 = vadd.f32 %v374, %v458
      %v460 = vpop.f32.mrf.mxu0
      %v461 = vadd.f32 %v374, %v460
      %462 = vmatmul.bf16.gmra.mxu0 %v411
      %v463 = vpop.f32.mrf.mxu0
      %v464 = vadd.f32 %v374, %v463
      %v465 = vpop.f32.mrf.mxu0
      %v466 = vadd.f32 %v374, %v465
      %467 = vmatmul.bf16.gmra.mxu0 %v414
      %v468 = vpop.f32.mrf.mxu0
      %v469 = vadd.f32 %v374, %v468
      %v470 = vpop.f32.mrf.mxu0
      %v471 = vadd.f32 %v374, %v470
      %472 = vmatmul.bf16.gmra.mxu0 %v417
      %v473 = vpop.f32.mrf.mxu0
      %v474 = vadd.f32 %v374, %v473
      %v475 = vpop.f32.mrf.mxu0
      %476 = vdwg.mxu0
      %v477 = vmax.f32 %v429, 0.0
      %v478 = vmax.f32 %v431, 0.0
      %v479 = vmax.f32 %v434, 0.0
      %v480 = vmax.f32 %v436, 0.0
      %v481 = vmax.f32 %v439, 0.0
      %v482 = vmax.f32 %v441, 0.0
      %v483 = vmax.f32 %v444, 0.0
      %v484 = vmax.f32 %v446, 0.0
      %v485 = vmax.f32 %v449, 0.0
      %v486 = vmax.f32 %v451, 0.0
      %v487 = vmax.f32 %v454, 0.0
      %v488 = vmax.f32 %v456, 0.0
      %v489 = vmax.f32 %v459, 0.0
      %v490 = vmax.f32 %v461, 0.0
      %v491 = vmax.f32 %v464, 0.0
      %v492 = vmax.f32 %v466, 0.0
      %v493 = vmax.f32 %v469, 0.0
      %v494 = vmax.f32 %v471, 0.0
      %v495 = vmax.f32 %v474, 0.0
      %v496 = vpack.c.bf16 %v478, %v477
      %v497 = vpack.c.bf16 %v480, %v479
      %v498 = vpack.c.bf16 %v482, %v481
      %v499 = vpack.c.bf16 %v484, %v483
      %v500 = vpack.c.bf16 %v486, %v485
      %v501 = vpack.c.bf16 %v488, %v487
      %v502 = vpack.c.bf16 %v490, %v489
      %v503 = vpack.c.bf16 %v492, %v491
      %v504 = vpack.c.bf16 %v494, %v493
      %v505 = vpack.c.bf16 %v495, %v495
      %v506 = vld [vmem:[%s3] sm:$0xf]
      %v507 = vld [vmem:[%s3 + $0x4] sm:$0xf]
      %v508 = vld [vmem:[%s3 + $0x8] sm:$0xf]
      %v509 = vld [vmem:[%s3 + $0xc] sm:$0xf]
      %v510 = vld [vmem:[%s3 + $0x10] sm:$0xf]
      %v511 = vld [vmem:[%s3 + $0x14] sm:$0xf]
      %v512 = vld [vmem:[%s3 + $0x18] sm:$0xf]
      %v513 = vld [vmem:[%s3 + $0x1c] sm:$0xf]
      %v514 = vld [vmem:[%s3 + $0x20] sm:$0xf]
      %v515 = vld [vmem:[%s3 + $0x24] sm:$0xf]
      %v516 = vld [vmem:[%s3 + $0x28] sm:$0xf]
      %v517 = vld [vmem:[%s3 + $0x2c] sm:$0xf]
      %v518 = vld [vmem:[%s3 + $0x30] sm:$0xf]
      %v519 = vld [vmem:[%s3 + $0x34] sm:$0xf]
      %v520 = vld [vmem:[%s3 + $0x38] sm:$0xf]
      %v521 = vld [vmem:[%s3 + $0x3c] sm:$0xf]
      %v522 = vld [vmem:[%s4] sm:$0x1]
      %v524 = vperm.slane %v522, 0
      %v542 = vunpack.c.l.b16 %v506
      %v543 = vunpack.c.l.b16 %v507
      %v544 = vunpack.c.l.b16 %v508
      %v545 = vunpack.c.l.b16 %v509
      %v546 = vunpack.c.l.b16 %v510
      %v547 = vunpack.c.l.b16 %v511
      %v548 = vunpack.c.l.b16 %v512
      %v549 = vunpack.c.l.b16 %v513
      %v550 = vunpack.c.l.b16 %v514
      %v551 = vunpack.c.l.b16 %v515
      %v552 = vunpack.c.l.b16 %v516
      %v553 = vunpack.c.l.b16 %v517
      %v554 = vunpack.c.l.b16 %v518
      %v555 = vunpack.c.l.b16 %v519
      %v556 = vunpack.c.l.b16 %v520
      %v557 = vunpack.c.l.b16 %v521
      %v558 = vpack.c.b16 %v543, %v542
      %v559 = vpack.c.b16 %v545, %v544
      %v560 = vpack.c.b16 %v547, %v546
      %v561 = vpack.c.b16 %v549, %v548
      %v562 = vpack.c.b16 %v551, %v550
      %v563 = vpack.c.b16 %v553, %v552
      %v564 = vpack.c.b16 %v555, %v554
      %v565 = vpack.c.b16 %v557, %v556
      %574 = vmatpush.bf16.msra.mxu0 %v565
      %575 = vmatpush.bf16.msra.mxu0 %v564
      %576 = vmatpush.bf16.msra.mxu0 %v563
      %577 = vmatpush.bf16.msra.mxu0 %v562
      %578 = vmatpush.bf16.msra.mxu0 %v561
      %579 = vmatpush.bf16.msra.mxu0 %v560
      %580 = vmatpush.bf16.msra.mxu0 %v559
      %581 = vmatpush.bf16.msra.mxu0 %v558
      %582 = vmatmul.bf16.gmra.mxu0 %v496
      %v583 = vpop.f32.mrf.mxu0
      %v584 = vadd.f32 %v524, %v583
      %v585 = vpop.f32.mrf.mxu0
      %v586 = vadd.f32 %v524, %v585
      %587 = vmatmul.bf16.gmra.mxu0 %v497
      %v588 = vpop.f32.mrf.mxu0
      %v589 = vadd.f32 %v524, %v588
      %v590 = vpop.f32.mrf.mxu0
      %v591 = vadd.f32 %v524, %v590
      %592 = vmatmul.bf16.gmra.mxu0 %v498
      %v593 = vpop.f32.mrf.mxu0
      %v594 = vadd.f32 %v524, %v593
      %v595 = vpop.f32.mrf.mxu0
      %v596 = vadd.f32 %v524, %v595
      %597 = vmatmul.bf16.gmra.mxu0 %v499
      %v598 = vpop.f32.mrf.mxu0
      %v599 = vadd.f32 %v524, %v598
      %v600 = vpop.f32.mrf.mxu0
      %v601 = vadd.f32 %v524, %v600
      %602 = vmatmul.bf16.gmra.mxu0 %v500
      %v603 = vpop.f32.mrf.mxu0
      %v604 = vadd.f32 %v524, %v603
      %v605 = vpop.f32.mrf.mxu0
      %v606 = vadd.f32 %v524, %v605
      %607 = vmatmul.bf16.gmra.mxu0 %v501
      %v608 = vpop.f32.mrf.mxu0
      %v609 = vadd.f32 %v524, %v608
      %v610 = vpop.f32.mrf.mxu0
      %v611 = vadd.f32 %v524, %v610
      %612 = vmatmul.bf16.gmra.mxu0 %v502
      %v613 = vpop.f32.mrf.mxu0
      %v614 = vadd.f32 %v524, %v613
      %v615 = vpop.f32.mrf.mxu0
      %v616 = vadd.f32 %v524, %v615
      %617 = vmatmul.bf16.gmra.mxu0 %v503
      %v618 = vpop.f32.mrf.mxu0
      %v619 = vadd.f32 %v524, %v618
      %v620 = vpop.f32.mrf.mxu0
      %v621 = vadd.f32 %v524, %v620
      %622 = vmatmul.bf16.gmra.mxu0 %v504
      %v623 = vpop.f32.mrf.mxu0
      %v624 = vadd.f32 %v524, %v623
      %v625 = vpop.f32.mrf.mxu0
      %v626 = vadd.f32 %v524, %v625
      %627 = vmatmul.bf16.gmra.mxu0 %v505
      %v628 = vpop.f32.mrf.mxu0
      %v629 = vadd.f32 %v524, %v628
      %v630 = vpop.f32.mrf.mxu0
      %631 = vdwg.mxu0
      %v632 = vtanh.pop %v584
      %v633 = vtanh.pop %v586
      %v634 = vtanh.pop %v589
      %v635 = vtanh.pop %v591
      %v636 = vtanh.pop %v594
      %v637 = vtanh.pop %v596
      %v638 = vtanh.pop %v599
      %v639 = vtanh.pop %v601
      %v640 = vtanh.pop %v604
      %v641 = vtanh.pop %v606
      %v642 = vtanh.pop %v609
      %v643 = vtanh.pop %v611
      %v644 = vtanh.pop %v614
      %v645 = vtanh.pop %v616
      %v646 = vtanh.pop %v619
      %v647 = vtanh.pop %v621
      %v648 = vtanh.pop %v624
      %v649 = vtanh.pop %v626
      %v650 = vtanh.pop %v629
      %v651 = vpack.c.bf16 %v633, %v632
      %v652 = vpack.c.bf16 %v635, %v634
      %v653 = vpack.c.bf16 %v637, %v636
      %v654 = vpack.c.bf16 %v639, %v638
      %v655 = vpack.c.bf16 %v641, %v640
      %v656 = vpack.c.bf16 %v643, %v642
      %v657 = vpack.c.bf16 %v645, %v644
      %v658 = vpack.c.bf16 %v647, %v646
      %v659 = vpack.c.bf16 %v649, %v648
      %v660 = vpack.c.bf16 %v650, %v650
      %v661 = vld [vmem:[%s5] sm:$0xf]
      %v662 = vld [vmem:[%s5 + $0x4] sm:$0xf]
      %v663 = vld [vmem:[%s5 + $0x8] sm:$0xf]
      %v664 = vld [vmem:[%s5 + $0xc] sm:$0xf]
      %v665 = vld [vmem:[%s5 + $0x10] sm:$0xf]
      %v666 = vld [vmem:[%s5 + $0x14] sm:$0xf]
      %v667 = vld [vmem:[%s5 + $0x18] sm:$0xf]
      %v668 = vld [vmem:[%s5 + $0x1c] sm:$0xf]
      %v669 = vld [vmem:[%s6] sm:$0x1]
      %v671 = vperm.slane %v669, 0
      %v681 = vunpack.c.l.b16 %v661
      %v682 = vunpack.c.l.b16 %v662
      %v683 = vunpack.c.l.b16 %v663
      %v684 = vunpack.c.l.b16 %v664
      %v685 = vunpack.c.l.b16 %v665
      %v686 = vunpack.c.l.b16 %v666
      %v687 = vunpack.c.l.b16 %v667
      %v688 = vunpack.c.l.b16 %v668
      %v689 = vpack.c.b16 %v682, %v681
      %v690 = vpack.c.b16 %v684, %v683
      %v691 = vpack.c.b16 %v686, %v685
      %v692 = vpack.c.b16 %v688, %v687
      %vm697 = vcmask 523264
      %v699 = vsel %vm697, %v651, 0
      %v702 = vsel %vm697, %v652, 0
      %v705 = vsel %vm697, %v653, 0
      %v708 = vsel %vm697, %v654, 0
      %v711 = vsel %vm697, %v655, 0
      %v714 = vsel %vm697, %v656, 0
      %v717 = vsel %vm697, %v657, 0
      %v720 = vsel %vm697, %v658, 0
      %v723 = vsel %vm697, %v659, 0
      %v726 = vsel %vm697, %v660, 0
      %728 = vmatpush.bf16.msra.mxu0 0
      %729 = vmatpush.bf16.msra.mxu0 0
      %730 = vmatpush.bf16.msra.mxu0 0
      %731 = vmatpush.bf16.msra.mxu0 0
      %732 = vmatpush.bf16.msra.mxu0 %v692
      %733 = vmatpush.bf16.msra.mxu0 %v691
      %734 = vmatpush.bf16.msra.mxu0 %v690
      %735 = vmatpush.bf16.msra.mxu0 %v689
      %736 = vmatmul.bf16.gmra.mxu0 %v699
      %v737 = vpop.f32.mrf.mxu0
      %v738 = vadd.f32 %v671, %v737
      %v739 = vpop.f32.mrf.mxu0
      %v740 = vadd.f32 %v671, %v739
      %741 = vmatmul.bf16.gmra.mxu0 %v702
      %v742 = vpop.f32.mrf.mxu0
      %v743 = vadd.f32 %v671, %v742
      %v744 = vpop.f32.mrf.mxu0
      %v745 = vadd.f32 %v671, %v744
      %746 = vmatmul.bf16.gmra.mxu0 %v705
      %v747 = vpop.f32.mrf.mxu0
      %v748 = vadd.f32 %v671, %v747
      %v749 = vpop.f32.mrf.mxu0
      %v750 = vadd.f32 %v671, %v749
      %751 = vmatmul.bf16.gmra.mxu0 %v708
      %v752 = vpop.f32.mrf.mxu0
      %v753 = vadd.f32 %v671, %v752
      %v754 = vpop.f32.mrf.mxu0
      %v755 = vadd.f32 %v671, %v754
      %756 = vmatmul.bf16.gmra.mxu0 %v711
      %v757 = vpop.f32.mrf.mxu0
      %v758 = vadd.f32 %v671, %v757
      %v759 = vpop.f32.mrf.mxu0
      %v760 = vadd.f32 %v671, %v759
      %761 = vmatmul.bf16.gmra.mxu0 %v714
      %v762 = vpop.f32.mrf.mxu0
      %v763 = vadd.f32 %v671, %v762
      %v764 = vpop.f32.mrf.mxu0
      %v765 = vadd.f32 %v671, %v764
      %766 = vmatmul.bf16.gmra.mxu0 %v717
      %v767 = vpop.f32.mrf.mxu0
      %v768 = vadd.f32 %v671, %v767
      %v769 = vpop.f32.mrf.mxu0
      %v770 = vadd.f32 %v671, %v769
      %771 = vmatmul.bf16.gmra.mxu0 %v720
      %v772 = vpop.f32.mrf.mxu0
      %v773 = vadd.f32 %v671, %v772
      %v774 = vpop.f32.mrf.mxu0
      %v775 = vadd.f32 %v671, %v774
      %776 = vmatmul.bf16.gmra.mxu0 %v723
      %v777 = vpop.f32.mrf.mxu0
      %v778 = vadd.f32 %v671, %v777
      %v779 = vpop.f32.mrf.mxu0
      %v780 = vadd.f32 %v671, %v779
      %781 = vmatmul.bf16.gmra.mxu0 %v726
      %v782 = vpop.f32.mrf.mxu0
      %v783 = vadd.f32 %v671, %v782
      %v784 = vpop.f32.mrf.mxu0
      %785 = vdwg.mxu0
      %v786 = vxor.u32 %v738, 2147483648
      %v787 = vxor.u32 %v740, 2147483648
      %v788 = vxor.u32 %v743, 2147483648
      %v789 = vxor.u32 %v745, 2147483648
      %v790 = vxor.u32 %v748, 2147483648
      %v791 = vxor.u32 %v750, 2147483648
      %v792 = vxor.u32 %v753, 2147483648
      %v793 = vxor.u32 %v755, 2147483648
      %v794 = vxor.u32 %v758, 2147483648
      %v795 = vxor.u32 %v760, 2147483648
      %v796 = vxor.u32 %v763, 2147483648
      %v797 = vxor.u32 %v765, 2147483648
      %v798 = vxor.u32 %v768, 2147483648
      %v799 = vxor.u32 %v770, 2147483648
      %v800 = vxor.u32 %v773, 2147483648
      %v801 = vxor.u32 %v775, 2147483648
      %v802 = vxor.u32 %v778, 2147483648
      %v803 = vxor.u32 %v780, 2147483648
      %v804 = vxor.u32 %v783, 2147483648
      %v805 = vmul.f32 %v786, 1.442695
      %v806 = vpow.pop %v805
      %v807 = vmul.f32 %v787, 1.442695
      %v808 = vpow.pop %v807
      %v809 = vmul.f32 %v788, 1.442695
      %v810 = vpow.pop %v809
      %v811 = vmul.f32 %v789, 1.442695
      %v812 = vpow.pop %v811
      %v813 = vmul.f32 %v790, 1.442695
      %v814 = vpow.pop %v813
      %v815 = vmul.f32 %v791, 1.442695
      %v816 = vpow.pop %v815
      %v817 = vmul.f32 %v792, 1.442695
      %v818 = vpow.pop %v817
      %v819 = vmul.f32 %v793, 1.442695
      %v820 = vpow.pop %v819
      %v821 = vmul.f32 %v794, 1.442695
      %v822 = vpow.pop %v821
      %v823 = vmul.f32 %v795, 1.442695
      %v824 = vpow.pop %v823
      %v825 = vmul.f32 %v796, 1.442695
      %v826 = vpow.pop %v825
      %v827 = vmul.f32 %v797, 1.442695
      %v828 = vpow.pop %v827
      %v829 = vmul.f32 %v798, 1.442695
      %v830 = vpow.pop %v829
      %v831 = vmul.f32 %v799, 1.442695
      %v832 = vpow.pop %v831
      %v833 = vmul.f32 %v800, 1.442695
      %v834 = vpow.pop %v833
      %v835 = vmul.f32 %v801, 1.442695
      %v836 = vpow.pop %v835
      %v837 = vmul.f32 %v802, 1.442695
      %v838 = vpow.pop %v837
      %v839 = vmul.f32 %v803, 1.442695
      %v840 = vpow.pop %v839
      %v841 = vmul.f32 %v804, 1.442695
      %v842 = vpow.pop %v841
      %v843 = vadd.f32 %v806, 1.0
      %v844 = vadd.f32 %v808, 1.0
      %v845 = vadd.f32 %v810, 1.0
      %v846 = vadd.f32 %v812, 1.0
      %v847 = vadd.f32 %v814, 1.0
      %v848 = vadd.f32 %v816, 1.0
      %v849 = vadd.f32 %v818, 1.0
      %v850 = vadd.f32 %v820, 1.0
      %v851 = vadd.f32 %v822, 1.0
      %v852 = vadd.f32 %v824, 1.0
      %v853 = vadd.f32 %v826, 1.0
      %v854 = vadd.f32 %v828, 1.0
      %v855 = vadd.f32 %v830, 1.0
      %v856 = vadd.f32 %v832, 1.0
      %v857 = vadd.f32 %v834, 1.0
      %v858 = vadd.f32 %v836, 1.0
      %v859 = vadd.f32 %v838, 1.0
      %v860 = vadd.f32 %v840, 1.0
      %v861 = vadd.f32 %v842, 1.0
      %v862 = vrcp.pop %v843
      %v863 = vmul.f32 %v843, %v862
      %v864 = vsub.f32 1.0, %v863
      %v865 = vmul.f32 %v862, %v864
      %v866 = vadd.f32 %v862, %v865
      %vm867 = vweird.f32 %v843
      %vm868 = vweird.f32 %v862
      %vm869 = vmor %vm867, %vm868
      %v870 = vsel %vm869, %v862, %v866
      %v871 = vand.u32 2147483647, %v843
      %vm872 = vcmp.eq.f32.partialorder %v871, 8.507059e+37
      %v873 = vand.u32 %v843, 2147483648
      %v874 = vor.u32 1.1754944e-38, %v873
      %v875 = vsel %vm872, %v874, %v870
      %v876 = vmul.f32 1.0, %v875
      %v877 = vrcp.pop %v844
      %v878 = vmul.f32 %v844, %v877
      %v879 = vsub.f32 1.0, %v878
      %v880 = vmul.f32 %v877, %v879
      %v881 = vadd.f32 %v877, %v880
      %vm882 = vweird.f32 %v844
      %vm883 = vweird.f32 %v877
      %vm884 = vmor %vm882, %vm883
      %v885 = vsel %vm884, %v877, %v881
      %v886 = vand.u32 2147483647, %v844
      %vm887 = vcmp.eq.f32.partialorder %v886, 8.507059e+37
      %v888 = vand.u32 %v844, 2147483648
      %v889 = vor.u32 1.1754944e-38, %v888
      %v890 = vsel %vm887, %v889, %v885
      %v891 = vmul.f32 1.0, %v890
      %v892 = vrcp.pop %v845
      %v893 = vmul.f32 %v845, %v892
      %v894 = vsub.f32 1.0, %v893
      %v895 = vmul.f32 %v892, %v894
      %v896 = vadd.f32 %v892, %v895
      %vm897 = vweird.f32 %v845
      %vm898 = vweird.f32 %v892
      %vm899 = vmor %vm897, %vm898
      %v900 = vsel %vm899, %v892, %v896
      %v901 = vand.u32 2147483647, %v845
      %vm902 = vcmp.eq.f32.partialorder %v901, 8.507059e+37
      %v903 = vand.u32 %v845, 2147483648
      %v904 = vor.u32 1.1754944e-38, %v903
      %v905 = vsel %vm902, %v904, %v900
      %v906 = vmul.f32 1.0, %v905
      %v907 = vrcp.pop %v846
      %v908 = vmul.f32 %v846, %v907
      %v909 = vsub.f32 1.0, %v908
      %v910 = vmul.f32 %v907, %v909
      %v911 = vadd.f32 %v907, %v910
      %vm912 = vweird.f32 %v846
      %vm913 = vweird.f32 %v907
      %vm914 = vmor %vm912, %vm913
      %v915 = vsel %vm914, %v907, %v911
      %v916 = vand.u32 2147483647, %v846
      %vm917 = vcmp.eq.f32.partialorder %v916, 8.507059e+37
      %v918 = vand.u32 %v846, 2147483648
      %v919 = vor.u32 1.1754944e-38, %v918
      %v920 = vsel %vm917, %v919, %v915
      %v921 = vmul.f32 1.0, %v920
      %v922 = vrcp.pop %v847
      %v923 = vmul.f32 %v847, %v922
      %v924 = vsub.f32 1.0, %v923
      %v925 = vmul.f32 %v922, %v924
      %v926 = vadd.f32 %v922, %v925
      %vm927 = vweird.f32 %v847
      %vm928 = vweird.f32 %v922
      %vm929 = vmor %vm927, %vm928
      %v930 = vsel %vm929, %v922, %v926
      %v931 = vand.u32 2147483647, %v847
      %vm932 = vcmp.eq.f32.partialorder %v931, 8.507059e+37
      %v933 = vand.u32 %v847, 2147483648
      %v934 = vor.u32 1.1754944e-38, %v933
      %v935 = vsel %vm932, %v934, %v930
      %v936 = vmul.f32 1.0, %v935
      %v937 = vrcp.pop %v848
      %v938 = vmul.f32 %v848, %v937
      %v939 = vsub.f32 1.0, %v938
      %v940 = vmul.f32 %v937, %v939
      %v941 = vadd.f32 %v937, %v940
      %vm942 = vweird.f32 %v848
      %vm943 = vweird.f32 %v937
      %vm944 = vmor %vm942, %vm943
      %v945 = vsel %vm944, %v937, %v941
      %v946 = vand.u32 2147483647, %v848
      %vm947 = vcmp.eq.f32.partialorder %v946, 8.507059e+37
      %v948 = vand.u32 %v848, 2147483648
      %v949 = vor.u32 1.1754944e-38, %v948
      %v950 = vsel %vm947, %v949, %v945
      %v951 = vmul.f32 1.0, %v950
      %v952 = vrcp.pop %v849
      %v953 = vmul.f32 %v849, %v952
      %v954 = vsub.f32 1.0, %v953
      %v955 = vmul.f32 %v952, %v954
      %v956 = vadd.f32 %v952, %v955
      %vm957 = vweird.f32 %v849
      %vm958 = vweird.f32 %v952
      %vm959 = vmor %vm957, %vm958
      %v960 = vsel %vm959, %v952, %v956
      %v961 = vand.u32 2147483647, %v849
      %vm962 = vcmp.eq.f32.partialorder %v961, 8.507059e+37
      %v963 = vand.u32 %v849, 2147483648
      %v964 = vor.u32 1.1754944e-38, %v963
      %v965 = vsel %vm962, %v964, %v960
      %v966 = vmul.f32 1.0, %v965
      %v967 = vrcp.pop %v850
      %v968 = vmul.f32 %v850, %v967
      %v969 = vsub.f32 1.0, %v968
      %v970 = vmul.f32 %v967, %v969
      %v971 = vadd.f32 %v967, %v970
      %vm972 = vweird.f32 %v850
      %vm973 = vweird.f32 %v967
      %vm974 = vmor %vm972, %vm973
      %v975 = vsel %vm974, %v967, %v971
      %v976 = vand.u32 2147483647, %v850
      %vm977 = vcmp.eq.f32.partialorder %v976, 8.507059e+37
      %v978 = vand.u32 %v850, 2147483648
      %v979 = vor.u32 1.1754944e-38, %v978
      %v980 = vsel %vm977, %v979, %v975
      %v981 = vmul.f32 1.0, %v980
      %v982 = vrcp.pop %v851
      %v983 = vmul.f32 %v851, %v982
      %v984 = vsub.f32 1.0, %v983
      %v985 = vmul.f32 %v982, %v984
      %v986 = vadd.f32 %v982, %v985
      %vm987 = vweird.f32 %v851
      %vm988 = vweird.f32 %v982
      %vm989 = vmor %vm987, %vm988
      %v990 = vsel %vm989, %v982, %v986
      %v991 = vand.u32 2147483647, %v851
      %vm992 = vcmp.eq.f32.partialorder %v991, 8.507059e+37
      %v993 = vand.u32 %v851, 2147483648
      %v994 = vor.u32 1.1754944e-38, %v993
      %v995 = vsel %vm992, %v994, %v990
      %v996 = vmul.f32 1.0, %v995
      %v997 = vrcp.pop %v852
      %v998 = vmul.f32 %v852, %v997
      %v999 = vsub.f32 1.0, %v998
      %v1000 = vmul.f32 %v997, %v999
      %v1001 = vadd.f32 %v997, %v1000
      %vm1002 = vweird.f32 %v852
      %vm1003 = vweird.f32 %v997
      %vm1004 = vmor %vm1002, %vm1003
      %v1005 = vsel %vm1004, %v997, %v1001
      %v1006 = vand.u32 2147483647, %v852
      %vm1007 = vcmp.eq.f32.partialorder %v1006, 8.507059e+37
      %v1008 = vand.u32 %v852, 2147483648
      %v1009 = vor.u32 1.1754944e-38, %v1008
      %v1010 = vsel %vm1007, %v1009, %v1005
      %v1011 = vmul.f32 1.0, %v1010
      %v1012 = vrcp.pop %v853
      %v1013 = vmul.f32 %v853, %v1012
      %v1014 = vsub.f32 1.0, %v1013
      %v1015 = vmul.f32 %v1012, %v1014
      %v1016 = vadd.f32 %v1012, %v1015
      %vm1017 = vweird.f32 %v853
      %vm1018 = vweird.f32 %v1012
      %vm1019 = vmor %vm1017, %vm1018
      %v1020 = vsel %vm1019, %v1012, %v1016
      %v1021 = vand.u32 2147483647, %v853
      %vm1022 = vcmp.eq.f32.partialorder %v1021, 8.507059e+37
      %v1023 = vand.u32 %v853, 2147483648
      %v1024 = vor.u32 1.1754944e-38, %v1023
      %v1025 = vsel %vm1022, %v1024, %v1020
      %v1026 = vmul.f32 1.0, %v1025
      %v1027 = vrcp.pop %v854
      %v1028 = vmul.f32 %v854, %v1027
      %v1029 = vsub.f32 1.0, %v1028
      %v1030 = vmul.f32 %v1027, %v1029
      %v1031 = vadd.f32 %v1027, %v1030
      %vm1032 = vweird.f32 %v854
      %vm1033 = vweird.f32 %v1027
      %vm1034 = vmor %vm1032, %vm1033
      %v1035 = vsel %vm1034, %v1027, %v1031
      %v1036 = vand.u32 2147483647, %v854
      %vm1037 = vcmp.eq.f32.partialorder %v1036, 8.507059e+37
      %v1038 = vand.u32 %v854, 2147483648
      %v1039 = vor.u32 1.1754944e-38, %v1038
      %v1040 = vsel %vm1037, %v1039, %v1035
      %v1041 = vmul.f32 1.0, %v1040
      %v1042 = vrcp.pop %v855
      %v1043 = vmul.f32 %v855, %v1042
      %v1044 = vsub.f32 1.0, %v1043
      %v1045 = vmul.f32 %v1042, %v1044
      %v1046 = vadd.f32 %v1042, %v1045
      %vm1047 = vweird.f32 %v855
      %vm1048 = vweird.f32 %v1042
      %vm1049 = vmor %vm1047, %vm1048
      %v1050 = vsel %vm1049, %v1042, %v1046
      %v1051 = vand.u32 2147483647, %v855
      %vm1052 = vcmp.eq.f32.partialorder %v1051, 8.507059e+37
      %v1053 = vand.u32 %v855, 2147483648
      %v1054 = vor.u32 1.1754944e-38, %v1053
      %v1055 = vsel %vm1052, %v1054, %v1050
      %v1056 = vmul.f32 1.0, %v1055
      %v1057 = vrcp.pop %v856
      %v1058 = vmul.f32 %v856, %v1057
      %v1059 = vsub.f32 1.0, %v1058
      %v1060 = vmul.f32 %v1057, %v1059
      %v1061 = vadd.f32 %v1057, %v1060
      %vm1062 = vweird.f32 %v856
      %vm1063 = vweird.f32 %v1057
      %vm1064 = vmor %vm1062, %vm1063
      %v1065 = vsel %vm1064, %v1057, %v1061
      %v1066 = vand.u32 2147483647, %v856
      %vm1067 = vcmp.eq.f32.partialorder %v1066, 8.507059e+37
      %v1068 = vand.u32 %v856, 2147483648
      %v1069 = vor.u32 1.1754944e-38, %v1068
      %v1070 = vsel %vm1067, %v1069, %v1065
      %v1071 = vmul.f32 1.0, %v1070
      %v1072 = vrcp.pop %v857
      %v1073 = vmul.f32 %v857, %v1072
      %v1074 = vsub.f32 1.0, %v1073
      %v1075 = vmul.f32 %v1072, %v1074
      %v1076 = vadd.f32 %v1072, %v1075
      %vm1077 = vweird.f32 %v857
      %vm1078 = vweird.f32 %v1072
      %vm1079 = vmor %vm1077, %vm1078
      %v1080 = vsel %vm1079, %v1072, %v1076
      %v1081 = vand.u32 2147483647, %v857
      %vm1082 = vcmp.eq.f32.partialorder %v1081, 8.507059e+37
      %v1083 = vand.u32 %v857, 2147483648
      %v1084 = vor.u32 1.1754944e-38, %v1083
      %v1085 = vsel %vm1082, %v1084, %v1080
      %v1086 = vmul.f32 1.0, %v1085
      %v1087 = vrcp.pop %v858
      %v1088 = vmul.f32 %v858, %v1087
      %v1089 = vsub.f32 1.0, %v1088
      %v1090 = vmul.f32 %v1087, %v1089
      %v1091 = vadd.f32 %v1087, %v1090
      %vm1092 = vweird.f32 %v858
      %vm1093 = vweird.f32 %v1087
      %vm1094 = vmor %vm1092, %vm1093
      %v1095 = vsel %vm1094, %v1087, %v1091
      %v1096 = vand.u32 2147483647, %v858
      %vm1097 = vcmp.eq.f32.partialorder %v1096, 8.507059e+37
      %v1098 = vand.u32 %v858, 2147483648
      %v1099 = vor.u32 1.1754944e-38, %v1098
      %v1100 = vsel %vm1097, %v1099, %v1095
      %v1101 = vmul.f32 1.0, %v1100
      %v1102 = vrcp.pop %v859
      %v1103 = vmul.f32 %v859, %v1102
      %v1104 = vsub.f32 1.0, %v1103
      %v1105 = vmul.f32 %v1102, %v1104
      %v1106 = vadd.f32 %v1102, %v1105
      %vm1107 = vweird.f32 %v859
      %vm1108 = vweird.f32 %v1102
      %vm1109 = vmor %vm1107, %vm1108
      %v1110 = vsel %vm1109, %v1102, %v1106
      %v1111 = vand.u32 2147483647, %v859
      %vm1112 = vcmp.eq.f32.partialorder %v1111, 8.507059e+37
      %v1113 = vand.u32 %v859, 2147483648
      %v1114 = vor.u32 1.1754944e-38, %v1113
      %v1115 = vsel %vm1112, %v1114, %v1110
      %v1116 = vmul.f32 1.0, %v1115
      %v1117 = vrcp.pop %v860
      %v1118 = vmul.f32 %v860, %v1117
      %v1119 = vsub.f32 1.0, %v1118
      %v1120 = vmul.f32 %v1117, %v1119
      %v1121 = vadd.f32 %v1117, %v1120
      %vm1122 = vweird.f32 %v860
      %vm1123 = vweird.f32 %v1117
      %vm1124 = vmor %vm1122, %vm1123
      %v1125 = vsel %vm1124, %v1117, %v1121
      %v1126 = vand.u32 2147483647, %v860
      %vm1127 = vcmp.eq.f32.partialorder %v1126, 8.507059e+37
      %v1128 = vand.u32 %v860, 2147483648
      %v1129 = vor.u32 1.1754944e-38, %v1128
      %v1130 = vsel %vm1127, %v1129, %v1125
      %v1131 = vmul.f32 1.0, %v1130
      %v1132 = vrcp.pop %v861
      %v1133 = vmul.f32 %v861, %v1132
      %v1134 = vsub.f32 1.0, %v1133
      %v1135 = vmul.f32 %v1132, %v1134
      %v1136 = vadd.f32 %v1132, %v1135
      %vm1137 = vweird.f32 %v861
      %vm1138 = vweird.f32 %v1132
      %vm1139 = vmor %vm1137, %vm1138
      %v1140 = vsel %vm1139, %v1132, %v1136
      %v1141 = vand.u32 2147483647, %v861
      %vm1142 = vcmp.eq.f32.partialorder %v1141, 8.507059e+37
      %v1143 = vand.u32 %v861, 2147483648
      %v1144 = vor.u32 1.1754944e-38, %v1143
      %v1145 = vsel %vm1142, %v1144, %v1140
      %v1146 = vmul.f32 1.0, %v1145
      %v1147 = vld [vmem:[%s7] sm:$0x1]
      %v1149 = vperm.slane %v1147, 0
      %v1151 = vmul.f32 %v876, %v1149
      %v1152 = vmul.f32 %v891, %v1149
      %v1153 = vmul.f32 %v906, %v1149
      %v1154 = vmul.f32 %v921, %v1149
      %v1155 = vmul.f32 %v936, %v1149
      %v1156 = vmul.f32 %v951, %v1149
      %v1157 = vmul.f32 %v966, %v1149
      %v1158 = vmul.f32 %v981, %v1149
      %v1159 = vmul.f32 %v996, %v1149
      %v1160 = vmul.f32 %v1011, %v1149
      %v1161 = vmul.f32 %v1026, %v1149
      %v1162 = vmul.f32 %v1041, %v1149
      %v1163 = vmul.f32 %v1056, %v1149
      %v1164 = vmul.f32 %v1071, %v1149
      %v1165 = vmul.f32 %v1086, %v1149
      %v1166 = vmul.f32 %v1101, %v1149
      %v1167 = vmul.f32 %v1116, %v1149
      %v1168 = vmul.f32 %v1131, %v1149
      %v1169 = vmul.f32 %v1146, %v1149
      %v1170 = vsel %vm388, %v1151, 0.0
      %1171 = vadd.xlane.f32.xlu0 %v1170
      %v1172 = vpop.xlane.xlu0 %1171
      %v1173 = vsel %vm388, %v1152, 0.0
      %1174 = vadd.xlane.f32.xlu0 %v1173
      %v1175 = vpop.xlane.xlu0 %1174
      %v1176 = vsel %vm388, %v1153, 0.0
      %1177 = vadd.xlane.f32.xlu0 %v1176
      %v1178 = vpop.xlane.xlu0 %1177
      %v1179 = vsel %vm388, %v1154, 0.0
      %1180 = vadd.xlane.f32.xlu0 %v1179
      %v1181 = vpop.xlane.xlu0 %1180
      %v1182 = vsel %vm388, %v1155, 0.0
      %1183 = vadd.xlane.f32.xlu0 %v1182
      %v1184 = vpop.xlane.xlu0 %1183
      %v1185 = vsel %vm388, %v1156, 0.0
      %1186 = vadd.xlane.f32.xlu0 %v1185
      %v1187 = vpop.xlane.xlu0 %1186
      %v1188 = vsel %vm388, %v1157, 0.0
      %1189 = vadd.xlane.f32.xlu0 %v1188
      %v1190 = vpop.xlane.xlu0 %1189
      %v1191 = vsel %vm388, %v1158, 0.0
      %1192 = vadd.xlane.f32.xlu0 %v1191
      %v1193 = vpop.xlane.xlu0 %1192
      %v1194 = vsel %vm388, %v1159, 0.0
      %1195 = vadd.xlane.f32.xlu0 %v1194
      %v1196 = vpop.xlane.xlu0 %1195
      %v1197 = vsel %vm388, %v1160, 0.0
      %1198 = vadd.xlane.f32.xlu0 %v1197
      %v1199 = vpop.xlane.xlu0 %1198
      %v1200 = vsel %vm388, %v1161, 0.0
      %1201 = vadd.xlane.f32.xlu0 %v1200
      %v1202 = vpop.xlane.xlu0 %1201
      %v1203 = vsel %vm388, %v1162, 0.0
      %1204 = vadd.xlane.f32.xlu0 %v1203
      %v1205 = vpop.xlane.xlu0 %1204
      %v1206 = vsel %vm388, %v1163, 0.0
      %1207 = vadd.xlane.f32.xlu0 %v1206
      %v1208 = vpop.xlane.xlu0 %1207
      %v1209 = vsel %vm388, %v1164, 0.0
      %1210 = vadd.xlane.f32.xlu0 %v1209
      %v1211 = vpop.xlane.xlu0 %1210
      %v1212 = vsel %vm388, %v1165, 0.0
      %1213 = vadd.xlane.f32.xlu0 %v1212
      %v1214 = vpop.xlane.xlu0 %1213
      %v1215 = vsel %vm388, %v1166, 0.0
      %1216 = vadd.xlane.f32.xlu0 %v1215
      %v1217 = vpop.xlane.xlu0 %1216
      %v1218 = vsel %vm388, %v1167, 0.0
      %1219 = vadd.xlane.f32.xlu0 %v1218
      %v1220 = vpop.xlane.xlu0 %1219
      %v1221 = vsel %vm388, %v1168, 0.0
      %1222 = vadd.xlane.f32.xlu0 %v1221
      %v1223 = vpop.xlane.xlu0 %1222
      %v1224 = vsel %vm388, %v1169, 0.0
      %1225 = vadd.xlane.f32.xlu0 %v1224
      %v1226 = vpop.xlane.xlu0 %1225
      %v1227 = vld [vmem:[#allocation2] sm:$0x1]
      %v1229 = vperm.slane %v1227, 0
      %v1231 = vadd.f32 %v1172, %v1229
      %v1232 = vadd.f32 %v1175, %v1229
      %v1233 = vadd.f32 %v1178, %v1229
      %v1234 = vadd.f32 %v1181, %v1229
      %v1235 = vadd.f32 %v1184, %v1229
      %v1236 = vadd.f32 %v1187, %v1229
      %v1237 = vadd.f32 %v1190, %v1229
      %v1238 = vadd.f32 %v1193, %v1229
      %v1239 = vadd.f32 %v1196, %v1229
      %v1240 = vadd.f32 %v1199, %v1229
      %v1241 = vadd.f32 %v1202, %v1229
      %v1242 = vadd.f32 %v1205, %v1229
      %v1243 = vadd.f32 %v1208, %v1229
      %v1244 = vadd.f32 %v1211, %v1229
      %v1245 = vadd.f32 %v1214, %v1229
      %v1246 = vadd.f32 %v1217, %v1229
      %v1247 = vadd.f32 %v1220, %v1229
      %v1248 = vadd.f32 %v1223, %v1229
      %v1249 = vadd.f32 %v1226, %v1229
      %v1250 = vtanh.pop %v1231
      %v1251 = vtanh.pop %v1232
      %v1252 = vtanh.pop %v1233
      %v1253 = vtanh.pop %v1234
      %v1254 = vtanh.pop %v1235
      %v1255 = vtanh.pop %v1236
      %v1256 = vtanh.pop %v1237
      %v1257 = vtanh.pop %v1238
      %v1258 = vtanh.pop %v1239
      %v1259 = vtanh.pop %v1240
      %v1260 = vtanh.pop %v1241
      %v1261 = vtanh.pop %v1242
      %v1262 = vtanh.pop %v1243
      %v1263 = vtanh.pop %v1244
      %v1264 = vtanh.pop %v1245
      %v1265 = vtanh.pop %v1246
      %v1266 = vtanh.pop %v1247
      %v1267 = vtanh.pop %v1248
      %v1268 = vtanh.pop %v1249
      %vm1269 = vcmask 7168
      %1270 = vst.msk [vmem:[%s336] sm:$0xff] %vm1269, %v1250
      %1271 = vst.msk [vmem:[%s336 + $0x8] sm:$0xff] %vm1269, %v1251
      %1272 = vst.msk [vmem:[%s336 + $0x10] sm:$0xff] %vm1269, %v1252
      %1273 = vst.msk [vmem:[%s336 + $0x18] sm:$0xff] %vm1269, %v1253
      %1274 = vst.msk [vmem:[%s336 + $0x20] sm:$0xff] %vm1269, %v1254
      %1275 = vst.msk [vmem:[%s336 + $0x28] sm:$0xff] %vm1269, %v1255
      %1276 = vst.msk [vmem:[%s336 + $0x30] sm:$0xff] %vm1269, %v1256
      %1277 = vst.msk [vmem:[%s336 + $0x38] sm:$0xff] %vm1269, %v1257
      %1278 = vst.msk [vmem:[%s336 + $0x40] sm:$0xff] %vm1269, %v1258
      %1279 = vst.msk [vmem:[%s336 + $0x48] sm:$0xff] %vm1269, %v1259
      %1280 = vst.msk [vmem:[%s336 + $0x50] sm:$0xff] %vm1269, %v1260
      %1281 = vst.msk [vmem:[%s336 + $0x58] sm:$0xff] %vm1269, %v1261
      %1282 = vst.msk [vmem:[%s336 + $0x60] sm:$0xff] %vm1269, %v1262
      %1283 = vst.msk [vmem:[%s336 + $0x68] sm:$0xff] %vm1269, %v1263
      %1284 = vst.msk [vmem:[%s336 + $0x70] sm:$0xff] %vm1269, %v1264
      %1285 = vst.msk [vmem:[%s336 + $0x78] sm:$0xff] %vm1269, %v1265
      %1286 = vst.msk [vmem:[%s336 + $0x80] sm:$0xff] %vm1269, %v1266
      %1287 = vst.msk [vmem:[%s336 + $0x88] sm:$0xff] %vm1269, %v1267
      %1288 = vst.msk [vmem:[%s336 + $0x90] sm:$0xff] %vm1269, %v1268
      %s1289 = smul.u32 19, %s22
      %p1290 = scmp.lt.s32.totalorder %s1289, 37
      %s1291 = scalar_select %p1290, %s1289, 37
      %s1292 = smul.addr %s1291, 8
      %s1293 = scalar_lea.vmem %s9, %s1292
      // Predicated region
      $region57: #{net_forward.1} parent=55 // pred_check
        %p1294 = pneg %p234
      $region58: #{net_forward.1} parent=55 // pred_check_branch
        %1296 = sbr.rel (%p1294) target = $region60
      $region59: #{net_forward.1} parent=55 // pred_region
        %s1297 = smul.u32 19, %s22
      $region60: #{net_forward.1} parent=55 // pred_fallthru
        _
    $region56: #{net_forward.1} parent=5 // pred_fallthru
      _
    %p1298 = scmp.le.s32.totalorder 2, %s17
    // Predicated region
    $region61: #{net_forward.1} parent=5 // pred_check
      %p1299 = pneg %p1298
    $region62: #{net_forward.1} parent=5 // pred_check_branch
      %1301 = sbr.rel (%p1299) target = $region64
    $region63: #{net_forward.1} parent=5 // pred_region
      %s1302 = ssub.s32 %s17, 2
      // Predicated region
      $region65: #{net_forward.1} parent=63 // pred_check
        %p1303 = pneg %p240
      $region66: #{net_forward.1} parent=63 // pred_check_branch
        %1305 = sbr.rel (%p1303) target = $region68
      $region67: #{net_forward.1} parent=63 // pred_region
        %s1306 = smul.u32 19, %s23
        %p1307 = scmp.lt.s32.totalorder %s1306, 37
        %s1308 = scalar_select %p1307, %s1306, 37
        %s1309 = smul.addr %s1308, 8
        %s1310 = scalar_lea.vmem %s9, %s1309
      $region68: #{net_forward.1} parent=63 // pred_fallthru
        _
    $region64: #{net_forward.1} parent=5 // pred_fallthru
      _
  $region6: #{net_forward.1} parent=0 // loop_footer
    %s21 = sadd.s32 1, %s17
  $region7: #{net_forward.1} parent=0 // loop_footer_branch
    %16 = sbr.rel target = $region3
  $region8: #{net_forward.1} parent=0 // loop_exit
    _

</llo_original>
